<compile_context>
chip_gen: v5e
topology: v5e:2x2
jax: 0.10.0
libtpu: 0.0.40
codegen_flags: <defaults>
</compile_context>

<pallas_src>
import functools

import numpy as np
import jax
import jax.numpy as jnp
from jax import lax
from jax.experimental import pallas as pl
from jax.experimental.pallas import tpu as pltpu


# ----------------------------------------------------------------------------
# Fused Pallas kernel: ConvBR(3x3) -> ConvBR(3x3), `Bblk` images per grid step
# ----------------------------------------------------------------------------
def _dimred_kernel(x_ref, wt1_ref, b1_ref, wt2_ref, b2_ref, o_ref):
    # x_ref  : (Bblk, H, W*Cin)    bf16 lane-dense input block
    # wt1_ref: (3, W*Cin,  W*Cout) bf16 block-Toeplitz conv1 weight (BN scale folded in)
    # b1_ref : (1, W*Cout)         f32  folded BN bias, tiled W times along lanes
    # wt2_ref: (3, W*Cout, W*Cout) bf16 block-Toeplitz conv2 weight
    # b2_ref : (1, W*Cout)         f32
    # o_ref  : (Bblk, H, W*Cout)   f32  lane-dense output block
    B, H, _ = x_ref.shape
    WCout = o_ref.shape[2]

    def conv3x3_bias_relu(x, wt_ref, b_ref):
        # x: (B, H, W*C) bf16.  padding=1 along H is realised by the zero rows in the
        # kh-shifted lhs; padding=1 along W is baked into the zero blocks of the
        # block-Toeplitz weight, so no halo scratch / zero-fill pass is needed.
        wc = x.shape[2]
        zrow = jnp.zeros((B, 1, wc), x.dtype)
        top = jnp.concatenate([zrow, x[:, :-1, :]], axis=1)   # input rows h-1  (kh = 0)
        bot = jnp.concatenate([x[:, 1:, :], zrow], axis=1)    # input rows h+1  (kh = 2)
        y = jnp.dot(top.reshape(B * H, wc), wt_ref[0],
                    preferred_element_type=jnp.float32)
        y += jnp.dot(x.reshape(B * H, wc), wt_ref[1],
                     preferred_element_type=jnp.float32)
        y += jnp.dot(bot.reshape(B * H, wc), wt_ref[2],
                     preferred_element_type=jnp.float32)
        y = y + b_ref[...]                 # folded BatchNorm bias (scale is in the weight)
        return jnp.maximum(y, 0.0)         # ReLU -> (B*H, W*Cout) f32

    y1 = conv3x3_bias_relu(x_ref[...], wt1_ref, b1_ref)
    mid = y1.reshape(B, H, WCout).astype(jnp.bfloat16)   # stays on-chip, no HBM round-trip
    y2 = conv3x3_bias_relu(mid, wt2_ref, b2_ref)
    o_ref[...] = y2.reshape(B, H, WCout)


# ----------------------------------------------------------------------------
# Wrapper: NCHW in / NCHW out, like the PyTorch module
# ----------------------------------------------------------------------------
def _toeplitz_weight(w_hwio, scale, W):
    """(3,3,Cin,Cout) HWIO weight -> per-kh block-Toeplitz (3, W*Cin, W*Cout) bf16.

    Block (w_in, w_out) of slice kh equals w[kh, kw] with kw = w_in - w_out + 1 when
    0 <= kw <= 2, else zero -- i.e. the conv's W-direction sliding window *and* its
    zero padding are encoded in the matmul weight.  The BN scale is folded in here.
    """
    KH, KW, Cin, Cout = w_hwio.shape
    w = w_hwio * scale                              # fold BN scale over the Cout axis
    sel = np.zeros((KW, W, W), np.float32)
    for kw in range(KW):
        for wo in range(W):
            wi = wo + kw - 1
            if 0 <= wi < W:
                sel[kw, wi, wo] = 1.0
    wt = jnp.einsum("kxy,hkio->hxiyo", jnp.asarray(sel), w)
    return wt.reshape(KH, W * Cin, W * Cout).astype(jnp.bfloat16)


@functools.partial(jax.jit, static_argnames=("grid_blocks",))
def dimensional_reduction_forward(x_nchw, w1_hwio, s1, b1, w2_hwio, s2, b2,
                                  *, grid_blocks=None):
    N, Cin, H, W = x_nchw.shape
    Cout = w1_hwio.shape[-1]
    if grid_blocks is None:
        # 2 "parallel" steps feed both v7x TensorCores; use grid_blocks=1 on v5e/v6e to
        # fold the whole batch into one step (bigger matmul M, no per-step overhead).
        grid_blocks = 2 if (N % 2 == 0 and N >= 2) else 1
    Bblk = N // grid_blocks

    # Lane-dense input: NCHW -> NHWC -> (N, H, W*Cin) bf16 (one relayout pass).
    x = jnp.transpose(x_nchw, (0, 2, 3, 1)).reshape(N, H, W * Cin).astype(jnp.bfloat16)

    wt1 = _toeplitz_weight(w1_hwio, s1, W)            # (3, W*Cin,  W*Cout) bf16
    wt2 = _toeplitz_weight(w2_hwio, s2, W)            # (3, W*Cout, W*Cout) bf16
    b1t = jnp.tile(b1.astype(jnp.float32), W).reshape(1, W * Cout)
    b2t = jnp.tile(b2.astype(jnp.float32), W).reshape(1, W * Cout)

    flops = 2 * N * H * 3 * (W * Cin * W * Cout + W * Cout * W * Cout)
    bytes_accessed = (x.size * 2 + wt1.size * 2 + wt2.size * 2
                      + (b1t.size + b2t.size) * 4 + N * H * W * Cout * 4)

    out = pl.pallas_call(
        _dimred_kernel,
        out_shape=jax.ShapeDtypeStruct((N, H, W * Cout), jnp.float32),
        grid=(grid_blocks,),
        in_specs=[
            pl.BlockSpec((Bblk, H, W * Cin), lambda b: (b, 0, 0)),
            pl.BlockSpec((3, W * Cin, W * Cout), lambda b: (0, 0, 0)),
            pl.BlockSpec((1, W * Cout), lambda b: (0, 0)),
            pl.BlockSpec((3, W * Cout, W * Cout), lambda b: (0, 0, 0)),
            pl.BlockSpec((1, W * Cout), lambda b: (0, 0)),
        ],
        out_specs=pl.BlockSpec((Bblk, H, W * Cout), lambda b: (b, 0, 0)),
        compiler_params=pltpu.CompilerParams(
            dimension_semantics=("parallel",),        # megacore split on v7x
            vmem_limit_bytes=32 * 1024 * 1024),
        cost_estimate=pl.CostEstimate(flops=flops, transcendentals=0,
                                      bytes_accessed=bytes_accessed),
    )(x, wt1, b1t, wt2, b2t)

    # Lane-dense (N, H, W*Cout) -> NCHW for the PyTorch-facing boundary.
    return jnp.transpose(out.reshape(N, H, W, Cout), (0, 3, 1, 2))


# ----------------------------------------------------------------------------
# Parameter construction (deterministic, mirrors ConvBR.__init__ shapes)
# ----------------------------------------------------------------------------
def make_convbr_params(key, in_ch, out_ch, eps=1e-5):
    kw_, kg, kb, km, kv = jax.random.split(key, 5)
    fan_in = in_ch * 3 * 3
    # kaiming_normal_(a=1): std = sqrt(2 / ((1 + a^2) * fan_in)) = sqrt(1 / fan_in)
    w_oihw = jax.random.normal(kw_, (out_ch, in_ch, 3, 3), jnp.float32) * jnp.sqrt(1.0 / fan_in)
    w_hwio = jnp.transpose(w_oihw, (2, 3, 1, 0))  # OIHW -> HWIO

    gamma = 1.0 + 0.1 * jax.random.normal(kg, (out_ch,), jnp.float32)
    beta = 0.1 * jax.random.normal(kb, (out_ch,), jnp.float32)
    run_mean = 0.1 * jax.random.normal(km, (out_ch,), jnp.float32)
    run_var = 0.5 + jnp.abs(jax.random.normal(kv, (out_ch,), jnp.float32))

    # Fold BN (inference mode) into per-channel scale / bias.
    # TODO(synk): PyTorch default is training-mode BN (batch statistics); inference-mode
    # running-stat BN is implemented here.
    scale = gamma / jnp.sqrt(run_var + eps)
    bias = beta - run_mean * scale
    return dict(w_oihw=w_oihw, w_hwio=w_hwio, scale=scale, bias=bias)


# Pure-JAX reference (matches the kernel's bf16-operand / f32-accumulate numerics,
# with the BN scale folded into the weight before the bf16 cast, like the kernel).
def _convbr_ref(x_nchw, w_oihw, scale, bias):
    xq = x_nchw.astype(jnp.bfloat16).astype(jnp.float32)
    wq = (w_oihw * scale[:, None, None, None]).astype(jnp.bfloat16).astype(jnp.float32)
    y = lax.conv_general_dilated(
        xq, wq, window_strides=(1, 1), padding=((1, 1), (1, 1)),
        dimension_numbers=("NCHW", "OIHW", "NCHW"),
        preferred_element_type=jnp.float32)
    y = y + bias[None, :, None, None]
    return jnp.maximum(y, 0.0)


if __name__ == "__main__":
    N, Cin, Cout, H, W = 2, 8, 16, 16, 16

    key = jax.random.PRNGKey(0)
    kx, k1, k2 = jax.random.split(key, 3)
    x = jax.random.normal(kx, (N, Cin, H, W), jnp.float32)  # NCHW, like PyTorch

    p1 = make_convbr_params(k1, Cin, Cout)
    p2 = make_convbr_params(k2, Cout, Cout)

    out = dimensional_reduction_forward(
        x, p1["w_hwio"], p1["scale"], p1["bias"],
        p2["w_hwio"], p2["scale"], p2["bias"])
    out = jax.block_until_ready(out)

    # Check against the pure-JAX reference.
    ref = _convbr_ref(x, p1["w_oihw"], p1["scale"], p1["bias"])
    ref = _convbr_ref(ref, p2["w_oihw"], p2["scale"], p2["bias"])
    assert out.shape == (N, Cout, H, W)
    max_err = float(jnp.max(jnp.abs(out - ref)))
    assert jnp.allclose(out, ref, atol=2e-3, rtol=2e-3), max_err

    print("KERNEL_OK")
</pallas_src>

<mosaic_0001>
module attributes {stable_mosaic.version = 11 : i64} {
  func.func @_dimred_kernel(%arg0: i32, %arg1: memref<1x16x128xbf16, #tpu.memory_space<vmem>>, %arg2: memref<3x128x256xbf16, #tpu.memory_space<vmem>>, %arg3: memref<1x256xf32, #tpu.memory_space<vmem>>, %arg4: memref<3x256x256xbf16, #tpu.memory_space<vmem>>, %arg5: memref<1x256xf32, #tpu.memory_space<vmem>>, %arg6: memref<1x16x256xf32, #tpu.memory_space<vmem>>) attributes {dimension_semantics = [#tpu.dimension_semantics<parallel>], iteration_bounds = array<i64: 2>, scalar_prefetch = 0 : i64, scratch_operands = 0 : i64, tpu.core_type = #tpu.core_type<tc>, window_params = [{transform_indices = @transform_0, window_bounds = array<i64: 1, 16, 128>}, {pipeline_mode = #tpu.pipeline_mode<synchronous>, transform_indices = @transform_1, window_bounds = array<i64: 3, 128, 256>}, {pipeline_mode = #tpu.pipeline_mode<synchronous>, transform_indices = @transform_2, window_bounds = array<i64: 1, 256>}, {pipeline_mode = #tpu.pipeline_mode<synchronous>, transform_indices = @transform_3, window_bounds = array<i64: 3, 256, 256>}, {pipeline_mode = #tpu.pipeline_mode<synchronous>, transform_indices = @transform_4, window_bounds = array<i64: 1, 256>}, {transform_indices = @transform_5, window_bounds = array<i64: 1, 16, 256>}]} {
    %c0 = arith.constant 0 : index
    %c0_0 = arith.constant 0 : index
    %c0_1 = arith.constant 0 : index
    %0 = vector.load %arg1[%c0, %c0_0, %c0_1] : memref<1x16x128xbf16, #tpu.memory_space<vmem>>, vector<1x16x128xbf16>
    %cst = arith.constant 0.000000e+00 : bf16
    %1 = vector.broadcast %cst : bf16 to vector<1x1x128xbf16>
    %2 = vector.extract_strided_slice %0 {offsets = [0, 0, 0], sizes = [1, 15, 128], strides = [1, 1, 1]} : vector<1x16x128xbf16> to vector<1x15x128xbf16>
    %3 = tpu.concatenate %1, %2 in 1 : vector<1x1x128xbf16>, vector<1x15x128xbf16> -> vector<1x16x128xbf16>
    %4 = vector.extract_strided_slice %0 {offsets = [0, 1, 0], sizes = [1, 15, 128], strides = [1, 1, 1]} : vector<1x16x128xbf16> to vector<1x15x128xbf16>
    %5 = tpu.concatenate %4, %1 in 1 : vector<1x15x128xbf16>, vector<1x1x128xbf16> -> vector<1x16x128xbf16>
    %6 = vector.shape_cast %3 : vector<1x16x128xbf16> to vector<16x128xbf16>
    %c0_2 = arith.constant 0 : index
    %c0_3 = arith.constant 0 : index
    %c0_4 = arith.constant 0 : index
    %7 = vector.load %arg2[%c0_2, %c0_3, %c0_4] : memref<3x128x256xbf16, #tpu.memory_space<vmem>>, vector<1x128x256xbf16>
    %8 = vector.shape_cast %7 : vector<1x128x256xbf16> to vector<128x256xbf16>
    %cst_5 = arith.constant dense<0.000000e+00> : vector<16x256xf32>
    %9 = tpu.matmul %6, %8, %cst_5 {dimension_numbers = #tpu.dot_dimension_numbers<[1], [0], [0], [1], [0, 0, 1, 1], [], []>} : vector<16x128xbf16>, vector<128x256xbf16>, vector<16x256xf32> -> vector<16x256xf32>
    %10 = vector.shape_cast %0 : vector<1x16x128xbf16> to vector<16x128xbf16>
    %c1 = arith.constant 1 : index
    %c0_6 = arith.constant 0 : index
    %c0_7 = arith.constant 0 : index
    %11 = vector.load %arg2[%c1, %c0_6, %c0_7] : memref<3x128x256xbf16, #tpu.memory_space<vmem>>, vector<1x128x256xbf16>
    %12 = vector.shape_cast %11 : vector<1x128x256xbf16> to vector<128x256xbf16>
    %cst_8 = arith.constant dense<0.000000e+00> : vector<16x256xf32>
    %13 = tpu.matmul %10, %12, %cst_8 {dimension_numbers = #tpu.dot_dimension_numbers<[1], [0], [0], [1], [0, 0, 1, 1], [], []>} : vector<16x128xbf16>, vector<128x256xbf16>, vector<16x256xf32> -> vector<16x256xf32>
    %14 = arith.addf %9, %13 : vector<16x256xf32>
    %15 = vector.shape_cast %5 : vector<1x16x128xbf16> to vector<16x128xbf16>
    %c2 = arith.constant 2 : index
    %c0_9 = arith.constant 0 : index
    %c0_10 = arith.constant 0 : index
    %16 = vector.load %arg2[%c2, %c0_9, %c0_10] : memref<3x128x256xbf16, #tpu.memory_space<vmem>>, vector<1x128x256xbf16>
    %17 = vector.shape_cast %16 : vector<1x128x256xbf16> to vector<128x256xbf16>
    %cst_11 = arith.constant dense<0.000000e+00> : vector<16x256xf32>
    %18 = tpu.matmul %15, %17, %cst_11 {dimension_numbers = #tpu.dot_dimension_numbers<[1], [0], [0], [1], [0, 0, 1, 1], [], []>} : vector<16x128xbf16>, vector<128x256xbf16>, vector<16x256xf32> -> vector<16x256xf32>
    %19 = arith.addf %14, %18 : vector<16x256xf32>
    %c0_12 = arith.constant 0 : index
    %c0_13 = arith.constant 0 : index
    %20 = vector.load %arg3[%c0_12, %c0_13] : memref<1x256xf32, #tpu.memory_space<vmem>>, vector<1x256xf32>
    %21 = vector.broadcast %20 : vector<1x256xf32> to vector<16x256xf32>
    %22 = arith.addf %19, %21 : vector<16x256xf32>
    %cst_14 = arith.constant 0.000000e+00 : f32
    %23 = vector.broadcast %cst_14 : f32 to vector<16x256xf32>
    %24 = arith.maximumf %22, %23 : vector<16x256xf32>
    %25 = vector.shape_cast %24 : vector<16x256xf32> to vector<1x16x256xf32>
    %26 = arith.truncf %25 : vector<1x16x256xf32> to vector<1x16x256xbf16>
    %cst_15 = arith.constant 0.000000e+00 : bf16
    %27 = vector.broadcast %cst_15 : bf16 to vector<1x1x256xbf16>
    %28 = vector.extract_strided_slice %26 {offsets = [0, 0, 0], sizes = [1, 15, 256], strides = [1, 1, 1]} : vector<1x16x256xbf16> to vector<1x15x256xbf16>
    %29 = tpu.concatenate %27, %28 in 1 : vector<1x1x256xbf16>, vector<1x15x256xbf16> -> vector<1x16x256xbf16>
    %30 = vector.extract_strided_slice %26 {offsets = [0, 1, 0], sizes = [1, 15, 256], strides = [1, 1, 1]} : vector<1x16x256xbf16> to vector<1x15x256xbf16>
    %31 = tpu.concatenate %30, %27 in 1 : vector<1x15x256xbf16>, vector<1x1x256xbf16> -> vector<1x16x256xbf16>
    %32 = vector.shape_cast %29 : vector<1x16x256xbf16> to vector<16x256xbf16>
    %c0_16 = arith.constant 0 : index
    %c0_17 = arith.constant 0 : index
    %c0_18 = arith.constant 0 : index
    %33 = vector.load %arg4[%c0_16, %c0_17, %c0_18] : memref<3x256x256xbf16, #tpu.memory_space<vmem>>, vector<1x256x256xbf16>
    %34 = vector.shape_cast %33 : vector<1x256x256xbf16> to vector<256x256xbf16>
    %cst_19 = arith.constant dense<0.000000e+00> : vector<16x256xf32>
    %35 = tpu.matmul %32, %34, %cst_19 {dimension_numbers = #tpu.dot_dimension_numbers<[1], [0], [0], [1], [0, 0, 1, 1], [], []>} : vector<16x256xbf16>, vector<256x256xbf16>, vector<16x256xf32> -> vector<16x256xf32>
    %36 = vector.shape_cast %26 : vector<1x16x256xbf16> to vector<16x256xbf16>
    %c1_20 = arith.constant 1 : index
    %c0_21 = arith.constant 0 : index
    %c0_22 = arith.constant 0 : index
    %37 = vector.load %arg4[%c1_20, %c0_21, %c0_22] : memref<3x256x256xbf16, #tpu.memory_space<vmem>>, vector<1x256x256xbf16>
    %38 = vector.shape_cast %37 : vector<1x256x256xbf16> to vector<256x256xbf16>
    %cst_23 = arith.constant dense<0.000000e+00> : vector<16x256xf32>
    %39 = tpu.matmul %36, %38, %cst_23 {dimension_numbers = #tpu.dot_dimension_numbers<[1], [0], [0], [1], [0, 0, 1, 1], [], []>} : vector<16x256xbf16>, vector<256x256xbf16>, vector<16x256xf32> -> vector<16x256xf32>
    %40 = arith.addf %35, %39 : vector<16x256xf32>
    %41 = vector.shape_cast %31 : vector<1x16x256xbf16> to vector<16x256xbf16>
    %c2_24 = arith.constant 2 : index
    %c0_25 = arith.constant 0 : index
    %c0_26 = arith.constant 0 : index
    %42 = vector.load %arg4[%c2_24, %c0_25, %c0_26] : memref<3x256x256xbf16, #tpu.memory_space<vmem>>, vector<1x256x256xbf16>
    %43 = vector.shape_cast %42 : vector<1x256x256xbf16> to vector<256x256xbf16>
    %cst_27 = arith.constant dense<0.000000e+00> : vector<16x256xf32>
    %44 = tpu.matmul %41, %43, %cst_27 {dimension_numbers = #tpu.dot_dimension_numbers<[1], [0], [0], [1], [0, 0, 1, 1], [], []>} : vector<16x256xbf16>, vector<256x256xbf16>, vector<16x256xf32> -> vector<16x256xf32>
    %45 = arith.addf %40, %44 : vector<16x256xf32>
    %c0_28 = arith.constant 0 : index
    %c0_29 = arith.constant 0 : index
    %46 = vector.load %arg5[%c0_28, %c0_29] : memref<1x256xf32, #tpu.memory_space<vmem>>, vector<1x256xf32>
    %47 = vector.broadcast %46 : vector<1x256xf32> to vector<16x256xf32>
    %48 = arith.addf %45, %47 : vector<16x256xf32>
    %cst_30 = arith.constant 0.000000e+00 : f32
    %49 = vector.broadcast %cst_30 : f32 to vector<16x256xf32>
    %50 = arith.maximumf %48, %49 : vector<16x256xf32>
    %51 = vector.shape_cast %50 : vector<16x256xf32> to vector<1x16x256xf32>
    %c0_31 = arith.constant 0 : index
    %c0_32 = arith.constant 0 : index
    %c0_33 = arith.constant 0 : index
    %52 = vector.load %arg6[%c0_31, %c0_32, %c0_33] : memref<1x16x256xf32, #tpu.memory_space<vmem>>, vector<1x16x256xf32>
    tpu.vector_store %arg6[%c0_31, %c0_32, %c0_33], %51 {strides = array<i32>} : memref<1x16x256xf32, #tpu.memory_space<vmem>>, vector<1x16x256xf32>,
    return
  }
  func.func @transform_0(%arg0: i32) -> (i32, i32, i32) {
    %c0_i32 = arith.constant 0 : i32
    %c0_i32_0 = arith.constant 0 : i32
    %c0_i32_1 = arith.constant 0 : i32
    return %arg0, %c0_i32, %c0_i32_0 : i32, i32, i32
  }
  func.func @transform_1(%arg0: i32) -> (i32, i32, i32) {
    %c0_i32 = arith.constant 0 : i32
    %c0_i32_0 = arith.constant 0 : i32
    %c0_i32_1 = arith.constant 0 : i32
    %c0_i32_2 = arith.constant 0 : i32
    return %c0_i32, %c0_i32_0, %c0_i32_1 : i32, i32, i32
  }
  func.func @transform_2(%arg0: i32) -> (i32, i32) {
    %c0_i32 = arith.constant 0 : i32
    %c0_i32_0 = arith.constant 0 : i32
    %c0_i32_1 = arith.constant 0 : i32
    return %c0_i32, %c0_i32_0 : i32, i32
  }
  func.func @transform_3(%arg0: i32) -> (i32, i32, i32) {
    %c0_i32 = arith.constant 0 : i32
    %c0_i32_0 = arith.constant 0 : i32
    %c0_i32_1 = arith.constant 0 : i32
    %c0_i32_2 = arith.constant 0 : i32
    return %c0_i32, %c0_i32_0, %c0_i32_1 : i32, i32, i32
  }
  func.func @transform_4(%arg0: i32) -> (i32, i32) {
    %c0_i32 = arith.constant 0 : i32
    %c0_i32_0 = arith.constant 0 : i32
    %c0_i32_1 = arith.constant 0 : i32
    return %c0_i32, %c0_i32_0 : i32, i32
  }
  func.func @transform_5(%arg0: i32) -> (i32, i32, i32) {
    %c0_i32 = arith.constant 0 : i32
    %c0_i32_0 = arith.constant 0 : i32
    %c0_i32_1 = arith.constant 0 : i32
    return %arg0, %c0_i32, %c0_i32_0 : i32, i32, i32
  }
}

</mosaic_0001>

<llo_original>
// kernel: tile.13
$region0: #{tile.13}
  #allocation0 [shape = 's32[1]{0}', space=sflag, size = 0x4, scoped, tag = 'scoped memory for tile.13']
  %s0 = inlined_call_operand.vmem [shape: f32[16], index: 0, kind: input, shape index: {}]
  %s1 = inlined_call_operand.vmem [shape: f32[16,16], index: 1, kind: output, shape index: {}]
  // Predicated region
  $region2: #{tile.13} parent=0 // pred_check
    _
  $region3: #{tile.13} parent=0 // pred_check_branch
    %3 = sbr.rel (0) target = $region5
  $region4: #{tile.13} parent=0 // pred_region
    _
  $region5: #{tile.13} parent=0 // pred_fallthru
    _
  %v4 = vld [vmem:[%s0] ss:$0 sm:$0xff]
  %5 = vst [vmem:[%s1] sm:$0xff] %v4
  %s6 = scalar_lea.vmem %s1, 8
  %7 = vst [vmem:[%s6] sm:$0xff] %v4

// kernel: tile.14
$region0: #{tile.14}
  %s0 = inlined_call_operand.vmem [shape: f32[16,16], index: 0, kind: input, shape index: {}]
  %s1 = inlined_call_operand.vmem [shape: f32[1,256], index: 1, kind: output, shape index: {}]
  $region1: #{tile.14} parent=0
    #allocation0 [shape = 'u8[8192]{0}', space=vmem, size = 0x2000, scoped, tag = 'scoped mem for output reshape']
    %s2 = smov 3
    %v3 = vld [vmem:[%s0] ss:$8 sm:%s2]
    %vm4 = vcmask 130048
    %5 = vst.msk [vmem:[#allocation0] ss:$8 sm:$0x3] %vm4, %v3
    %s6 = scalar_lea.vmem %s0, 7
    %s7 = smov 3
    %v8 = vld [vmem:[%s6] ss:$8 sm:%s7]
    %9 = vrot.lane.b32.xlu0 %v8, 112
    %v10 = vpop.permute.xlu0 %9
    %vm11 = vcmask 1048448
    %12 = vst.msk [vmem:[#allocation0] ss:$8 sm:$0x3] %vm11, %v10
    %s13 = scalar_lea.vmem %s0, 6
    %s14 = smov 3
    %v15 = vld [vmem:[%s13] ss:$8 sm:%s14]
    %16 = vrot.lane.b32.xlu0 %v15, 96
    %v17 = vpop.permute.xlu0 %16
    %vm18 = vcmask 917248
    %19 = vst.msk [vmem:[#allocation0] ss:$8 sm:$0x3] %vm18, %v17
    %s20 = scalar_lea.vmem %s0, 5
    %s21 = smov 3
    %v22 = vld [vmem:[%s20] ss:$8 sm:%s21]
    %23 = vrot.lane.b32.xlu0 %v22, 80
    %v24 = vpop.permute.xlu0 %23
    %vm25 = vcmask 786048
    %26 = vst.msk [vmem:[#allocation0] ss:$8 sm:$0x3] %vm25, %v24
    %s27 = scalar_lea.vmem %s0, 4
    %s28 = smov 3
    %v29 = vld [vmem:[%s27] ss:$8 sm:%s28]
    %30 = vrot.lane.b32.xlu0 %v29, 64
    %v31 = vpop.permute.xlu0 %30
    %vm32 = vcmask 654848
    %33 = vst.msk [vmem:[#allocation0] ss:$8 sm:$0x3] %vm32, %v31
    %s34 = scalar_lea.vmem %s0, 3
    %s35 = smov 3
    %v36 = vld [vmem:[%s34] ss:$8 sm:%s35]
    %37 = vrot.lane.b32.xlu0 %v36, 48
    %v38 = vpop.permute.xlu0 %37
    %vm39 = vcmask 523648
    %40 = vst.msk [vmem:[#allocation0] ss:$8 sm:$0x3] %vm39, %v38
    %s41 = scalar_lea.vmem %s0, 2
    %s42 = smov 3
    %v43 = vld [vmem:[%s41] ss:$8 sm:%s42]
    %44 = vrot.lane.b32.xlu0 %v43, 32
    %v45 = vpop.permute.xlu0 %44
    %vm46 = vcmask 392448
    %47 = vst.msk [vmem:[#allocation0] ss:$8 sm:$0x3] %vm46, %v45
    %s48 = scalar_lea.vmem %s0, 1
    %s49 = smov 3
    %v50 = vld [vmem:[%s48] ss:$8 sm:%s49]
    %51 = vrot.lane.b32.xlu0 %v50, 16
    %v52 = vpop.permute.xlu0 %51
    %vm53 = vcmask 261248
    %54 = vst.msk [vmem:[#allocation0] ss:$8 sm:$0x3] %vm53, %v52
    %s56 = ssub.s32 2, 1
    %v57 = vld [vmem:[#allocation0] sm:%s56]
    %s59 = ssub.s32 2, 1
    %60 = vst [vmem:[%s1] sm:%s59] %v57
    %s61 = scalar_lea.vmem [#allocation0], 8
    %v62 = vld [vmem:[%s61] sm:%s56]
    %s64 = ssub.s32 2, 1
    %s65 = scalar_lea.vmem %s1, 1
    %66 = vst [vmem:[%s65] sm:%s64] %v62

// kernel: dimensional_reduction_forward.1
$region0: #{dimensional_reduction_forward.1}
  #allocation0 [shape = 'u32[]', space=smem, size = 0x4, offset = 0x4, fixed_abs, tag = 'smem constant byte address 0x4 - core index']
  #allocation1 [shape = 'u32[72,128]{1,0:T(1,128)}', space=vmem, size = 0x9000, scoped, tag = 'internal scratch']
  %s0 = inlined_call_operand.vmem [shape: bf16[2,16,128], index: 0, kind: input, shape index: {}]
  %s1 = inlined_call_operand.vmem [shape: bf16[3,128,256], index: 1, kind: input, shape index: {}]
  %s2 = inlined_call_operand.vmem [shape: f32[1,256], index: 2, kind: input, shape index: {}]
  %s3 = inlined_call_operand.vmem [shape: bf16[3,256,256], index: 3, kind: input, shape index: {}]
  %s4 = inlined_call_operand.vmem [shape: f32[1,256], index: 4, kind: input, shape index: {}]
  %s5 = inlined_call_operand.vmem [shape: f32[2,16,256], index: 5, kind: output, shape index: {}]
  %s6 = sld [smem:[#allocation0]]
  $region53: #{dimensional_reduction_forward.1} parent=0
    _
  %s8 = ssub.s32 1, %s6
  %s9 = scalar_select 0, %s8, %s6
  loop: start=0, step=1, limit=4
  $region2: #{dimensional_reduction_forward.1} parent=0 // loop_pre_header
    _
  $region3: #{dimensional_reduction_forward.1} parent=0 // loop_header
    %s11 = sphi 0, %s15
    %p12 = scmp.ge.s32.totalorder %s11, 4
    %s21 = sphi 0, %s23
    %s24 = sphi 0, %s21
    %s25 = sphi 0, %s24
    %s41 = sphi 0, %s25
    %s45 = sphi 0, %s45
    %s47 = sphi 0, %s45
    %s48 = sphi 0, %s47
    %s62 = sphi 0, %s48
    %s66 = sphi 0, %s66
    %s68 = sphi 0, %s66
    %s69 = sphi 0, %s68
    %s83 = sphi 0, %s69
    %s87 = sphi 0, %s87
    %s89 = sphi 0, %s87
    %s90 = sphi 0, %s89
    %s104 = sphi 0, %s90
    %s108 = sphi 0, %s108
    %s110 = sphi 0, %s108
    %s111 = sphi 0, %s110
    %s125 = sphi 0, %s111
    %s131 = sphi 0, %s133
    %s134 = sphi 0, %s131
    %s135 = sphi 0, %s134
    %s151 = sphi 0, %s135
  $region4: #{dimensional_reduction_forward.1} parent=0 // loop_header_branch
    %14 = sbr.rel (%p12) target = $region8
  $region5: #{dimensional_reduction_forward.1} parent=0 // loop_body
    %s16 = ssub.s32 %s11, 1
    %s17 = ssub.s32 %s11, 2
    %s18 = sadd.s32 %s11, 1
    %s19 = ssub.s32 %s11, %s18
    %p20 = scmp.eq.s32.totalorder %s19, 0
    %s22 = sadd.s32 %s21, 1
    %s23 = scalar_select %p20, %s21, %s22
    %p26 = pneg %p20
    %p27 = scmp.eq.s32.totalorder %s11, 1
    %p28 = por %p26, %p27
    %p29 = scmp.ne.s32.totalorder %s21, %s24
    %p30 = scmp.eq.s32.totalorder %s11, 0
    %p31 = por %p29, %p30
    %p32 = scmp.ne.s32.totalorder %s21, %s24
    %p33 = scmp.eq.s32.totalorder %s16, 1
    %p34 = por %p32, %p33
    %p35 = scmp.ne.s32.totalorder %s24, %s25
    %p36 = scmp.eq.s32.totalorder %s16, 0
    %p37 = por %p35, %p36
    %p38 = scmp.ne.s32.totalorder %s24, %s25
    %p39 = scmp.eq.s32.totalorder %s17, 1
    %p40 = por %p38, %p39
    %p42 = scmp.ne.s32.totalorder %s25, %s41
    %p43 = scmp.eq.s32.totalorder %s17, 0
    %p44 = por %p42, %p43
    %s46 = sadd.s32 %s45, 1
    %p49 = scmp.eq.s32.totalorder %s11, 1
    %p50 = scmp.ne.s32.totalorder %s45, %s47
    %p51 = scmp.eq.s32.totalorder %s11, 0
    %p52 = por %p50, %p51
    %p53 = scmp.ne.s32.totalorder %s45, %s47
    %p54 = scmp.eq.s32.totalorder %s16, 1
    %p55 = por %p53, %p54
    %p56 = scmp.ne.s32.totalorder %s47, %s48
    %p57 = scmp.eq.s32.totalorder %s16, 0
    %p58 = por %p56, %p57
    %p59 = scmp.ne.s32.totalorder %s47, %s48
    %p60 = scmp.eq.s32.totalorder %s17, 1
    %p61 = por %p59, %p60
    %p63 = scmp.ne.s32.totalorder %s48, %s62
    %p64 = scmp.eq.s32.totalorder %s17, 0
    %p65 = por %p63, %p64
    %s67 = sadd.s32 %s66, 1
    %p70 = scmp.eq.s32.totalorder %s11, 1
    %p71 = scmp.ne.s32.totalorder %s66, %s68
    %p72 = scmp.eq.s32.totalorder %s11, 0
    %p73 = por %p71, %p72
    %p74 = scmp.ne.s32.totalorder %s66, %s68
    %p75 = scmp.eq.s32.totalorder %s16, 1
    %p76 = por %p74, %p75
    %p77 = scmp.ne.s32.totalorder %s68, %s69
    %p78 = scmp.eq.s32.totalorder %s16, 0
    %p79 = por %p77, %p78
    %p80 = scmp.ne.s32.totalorder %s68, %s69
    %p81 = scmp.eq.s32.totalorder %s17, 1
    %p82 = por %p80, %p81
    %p84 = scmp.ne.s32.totalorder %s69, %s83
    %p85 = scmp.eq.s32.totalorder %s17, 0
    %p86 = por %p84, %p85
    %s88 = sadd.s32 %s87, 1
    %p91 = scmp.eq.s32.totalorder %s11, 1
    %p92 = scmp.ne.s32.totalorder %s87, %s89
    %p93 = scmp.eq.s32.totalorder %s11, 0
    %p94 = por %p92, %p93
    %p95 = scmp.ne.s32.totalorder %s87, %s89
    %p96 = scmp.eq.s32.totalorder %s16, 1
    %p97 = por %p95, %p96
    %p98 = scmp.ne.s32.totalorder %s89, %s90
    %p99 = scmp.eq.s32.totalorder %s16, 0
    %p100 = por %p98, %p99
    %p101 = scmp.ne.s32.totalorder %s89, %s90
    %p102 = scmp.eq.s32.totalorder %s17, 1
    %p103 = por %p101, %p102
    %p105 = scmp.ne.s32.totalorder %s90, %s104
    %p106 = scmp.eq.s32.totalorder %s17, 0
    %p107 = por %p105, %p106
    %s109 = sadd.s32 %s108, 1
    %p112 = scmp.eq.s32.totalorder %s11, 1
    %p113 = scmp.ne.s32.totalorder %s108, %s110
    %p114 = scmp.eq.s32.totalorder %s11, 0
    %p115 = por %p113, %p114
    %p116 = scmp.ne.s32.totalorder %s108, %s110
    %p117 = scmp.eq.s32.totalorder %s16, 1
    %p118 = por %p116, %p117
    %p119 = scmp.ne.s32.totalorder %s110, %s111
    %p120 = scmp.eq.s32.totalorder %s16, 0
    %p121 = por %p119, %p120
    %p122 = scmp.ne.s32.totalorder %s110, %s111
    %p123 = scmp.eq.s32.totalorder %s17, 1
    %p124 = por %p122, %p123
    %p126 = scmp.ne.s32.totalorder %s111, %s125
    %p127 = scmp.eq.s32.totalorder %s17, 0
    %p128 = por %p126, %p127
    %s129 = ssub.s32 %s11, %s18
    %p130 = scmp.eq.s32.totalorder %s129, 0
    %s132 = sadd.s32 %s131, 1
    %s133 = scalar_select %p130, %s131, %s132
    %p136 = pneg %p130
    %p137 = scmp.eq.s32.totalorder %s11, 1
    %p138 = por %p136, %p137
    %p139 = scmp.ne.s32.totalorder %s131, %s134
    %p140 = scmp.eq.s32.totalorder %s11, 0
    %p141 = por %p139, %p140
    %p142 = scmp.ne.s32.totalorder %s131, %s134
    %p143 = scmp.eq.s32.totalorder %s16, 1
    %p144 = por %p142, %p143
    %p145 = scmp.ne.s32.totalorder %s134, %s135
    %p146 = scmp.eq.s32.totalorder %s16, 0
    %p147 = por %p145, %p146
    %p148 = scmp.ne.s32.totalorder %s134, %s135
    %p149 = scmp.eq.s32.totalorder %s17, 1
    %p150 = por %p148, %p149
    %p152 = scmp.ne.s32.totalorder %s135, %s151
    %p153 = scmp.eq.s32.totalorder %s17, 0
    %p154 = por %p152, %p153
    %p155 = scmp.le.s32.totalorder 1, %s11
    %p156 = scmp.lt.s32.totalorder %s11, 3
    %p157 = pnand %p155, %p156
    %p158 = pneg %p157
    // Predicated region
    $region9: #{dimensional_reduction_forward.1} parent=5 // pred_check
      _
    $region10: #{dimensional_reduction_forward.1} parent=5 // pred_check_branch
      %160 = sbr.rel (%p157) target = $region12
    $region11: #{dimensional_reduction_forward.1} parent=5 // pred_region
      %s161 = ssub.s32 %s11, 1
      // Predicated region
      $region13: #{dimensional_reduction_forward.1} parent=11 // pred_check
        %p162 = pneg %p58
      $region14: #{dimensional_reduction_forward.1} parent=11 // pred_check_branch
        %164 = sbr.rel (%p162) target = $region16
      $region15: #{dimensional_reduction_forward.1} parent=11 // pred_region
        _
      $region16: #{dimensional_reduction_forward.1} parent=11 // pred_fallthru
        _
      // Predicated region
      $region17: #{dimensional_reduction_forward.1} parent=11 // pred_check
        %p165 = pneg %p79
      $region18: #{dimensional_reduction_forward.1} parent=11 // pred_check_branch
        %167 = sbr.rel (%p165) target = $region20
      $region19: #{dimensional_reduction_forward.1} parent=11 // pred_region
        _
      $region20: #{dimensional_reduction_forward.1} parent=11 // pred_fallthru
        _
      // Predicated region
      $region21: #{dimensional_reduction_forward.1} parent=11 // pred_check
        %p168 = pneg %p100
      $region22: #{dimensional_reduction_forward.1} parent=11 // pred_check_branch
        %170 = sbr.rel (%p168) target = $region24
      $region23: #{dimensional_reduction_forward.1} parent=11 // pred_region
        _
      $region24: #{dimensional_reduction_forward.1} parent=11 // pred_fallthru
        _
      // Predicated region
      $region25: #{dimensional_reduction_forward.1} parent=11 // pred_check
        %p171 = pneg %p121
      $region26: #{dimensional_reduction_forward.1} parent=11 // pred_check_branch
        %173 = sbr.rel (%p171) target = $region28
      $region27: #{dimensional_reduction_forward.1} parent=11 // pred_region
        _
      $region28: #{dimensional_reduction_forward.1} parent=11 // pred_fallthru
        _
    $region12: #{dimensional_reduction_forward.1} parent=5 // pred_fallthru
      _
    %p174 = scmp.lt.s32.totalorder %s11, 2
    // Predicated region
    $region29: #{dimensional_reduction_forward.1} parent=5 // pred_check
      %p175 = pneg %p174
    $region30: #{dimensional_reduction_forward.1} parent=5 // pred_check_branch
      %177 = sbr.rel (%p175) target = $region32
    $region31: #{dimensional_reduction_forward.1} parent=5 // pred_region
      // Predicated region
      $region33: #{dimensional_reduction_forward.1} parent=31 // pred_check
        %p178 = pneg %p31
      $region34: #{dimensional_reduction_forward.1} parent=31 // pred_check_branch
        %180 = sbr.rel (%p178) target = $region36
      $region35: #{dimensional_reduction_forward.1} parent=31 // pred_region
        %p181 = scmp.lt.s32.totalorder %s11, 1
        %s182 = scalar_select %p181, %s11, 1
        %s183 = smul.addr %s182, 2
        %s184 = smul.addr %s183, 4
        %s185 = scalar_lea.vmem %s0, %s184
      $region36: #{dimensional_reduction_forward.1} parent=31 // pred_fallthru
        _
    $region32: #{dimensional_reduction_forward.1} parent=5 // pred_fallthru
      _
    %p186 = scmp.le.s32.totalorder 1, %s11
    %p187 = scmp.lt.s32.totalorder %s11, 3
    %p188 = pnand %p186, %p187
    %p189 = pneg %p188
    // Predicated region
    $region37: #{dimensional_reduction_forward.1} parent=5 // pred_check
      _
    $region38: #{dimensional_reduction_forward.1} parent=5 // pred_check_branch
      %191 = sbr.rel (%p188) target = $region40
    $region39: #{dimensional_reduction_forward.1} parent=5 // pred_region
      %s192 = ssub.s32 %s11, 1
      %p193 = scmp.lt.s32.totalorder %s16, 1
      %s194 = scalar_select %p193, %s16, 1
      %s195 = smul.addr %s194, 2
      %s196 = smul.addr %s195, 4
      %s197 = scalar_lea.vmem %s0, %s196
      %p198 = pneg %p37
      %p199 = pneg %p34
      %p200 = pneg %p58
      %p201 = pneg %p55
      %p202 = pneg %p79
      %p203 = pneg %p76
      %p204 = pneg %p100
      %p205 = pneg %p97
      %p206 = pneg %p121
      %p207 = pneg %p118
      %p208 = pneg %p147
      %p209 = pneg %p144
      %p210 = scmp.lt.s32.totalorder %s16, 1
      %s211 = scalar_select %p210, %s16, 1
      %s212 = smul.addr %s211, 4
      %s213 = smul.addr %s212, 8
      %s214 = scalar_lea.vmem %s5, %s213
      %p215 = scmp.lt.s32.totalorder %s16, 1
      %s216 = scalar_select %p215, %s16, 1
      %s217 = smul.addr %s216, 2
      %s218 = smul.addr %s217, 4
      %s219 = scalar_lea.vmem %s0, %s218
      %p220 = scmp.lt.s32.totalorder %s16, 1
      %s221 = scalar_select %p220, %s16, 1
      %s222 = smul.addr %s221, 4
      %s223 = smul.addr %s222, 8
      %s224 = scalar_lea.vmem %s5, %s223
      %v226 = vld [vmem:[%s219] sm:$0xf]
      %v227 = vld [vmem:[%s219 + $0x4] sm:$0xf]
      %v230 = vunpack.c.l.b16 %v226
      %v231 = vunpack.c.l.b16 %v227
      %v232 = vpack.c.b16 %v231, %v230
      %v234 = vshrl.u32 %v232, 16
      %v236 = vrot.slane %v234, 7
      %v237 = vshll.u32 %v232, 16
      %v239 = vor.u32 %v236, %v237
      %vm241 = vcmask 1040384
      %vm242 = vsmask.f32 256
      %vm243 = vmand %vm241, %vm242
      %v244 = vsel %vm243, 0, %v239
      %v245 = vrot.slane %v237, 1
      %v246 = vor.u32 %v234, %v245
      %vm248 = vcmask 1047552
      %vm249 = vsmask.f32 7424
      %vm250 = vmand %vm248, %vm249
      %v251 = vsel %vm250, %v246, 0
      %v252 = vld [vmem:[%s1] sm:$0xff]
      %v253 = vld [vmem:[%s1 + $0x8] sm:$0xff]
      %v254 = vld [vmem:[%s1 + $0x10] sm:$0xff]
      %v255 = vld [vmem:[%s1 + $0x18] sm:$0xff]
      %v256 = vld [vmem:[%s1 + $0x20] sm:$0xff]
      %v257 = vld [vmem:[%s1 + $0x28] sm:$0xff]
      %v258 = vld [vmem:[%s1 + $0x30] sm:$0xff]
      %v259 = vld [vmem:[%s1 + $0x38] sm:$0xff]
      %v260 = vld [vmem:[%s1 + $0x40] sm:$0xff]
      %v261 = vld [vmem:[%s1 + $0x48] sm:$0xff]
      %v262 = vld [vmem:[%s1 + $0x50] sm:$0xff]
      %v263 = vld [vmem:[%s1 + $0x58] sm:$0xff]
      %v264 = vld [vmem:[%s1 + $0x60] sm:$0xff]
      %v265 = vld [vmem:[%s1 + $0x68] sm:$0xff]
      %v266 = vld [vmem:[%s1 + $0x70] sm:$0xff]
      %v267 = vld [vmem:[%s1 + $0x78] sm:$0xff]
      %s268 = scalar_lea.vmem %s1, 128
      %v269 = vld [vmem:[%s268] sm:$0xff]
      %v270 = vld [vmem:[%s268 + $0x8] sm:$0xff]
      %v271 = vld [vmem:[%s268 + $0x10] sm:$0xff]
      %v272 = vld [vmem:[%s268 + $0x18] sm:$0xff]
      %v273 = vld [vmem:[%s268 + $0x20] sm:$0xff]
      %v274 = vld [vmem:[%s268 + $0x28] sm:$0xff]
      %v275 = vld [vmem:[%s268 + $0x30] sm:$0xff]
      %v276 = vld [vmem:[%s268 + $0x38] sm:$0xff]
      %v277 = vld [vmem:[%s268 + $0x40] sm:$0xff]
      %v278 = vld [vmem:[%s268 + $0x48] sm:$0xff]
      %v279 = vld [vmem:[%s268 + $0x50] sm:$0xff]
      %v280 = vld [vmem:[%s268 + $0x58] sm:$0xff]
      %v281 = vld [vmem:[%s268 + $0x60] sm:$0xff]
      %v282 = vld [vmem:[%s268 + $0x68] sm:$0xff]
      %v283 = vld [vmem:[%s268 + $0x70] sm:$0xff]
      %v284 = vld [vmem:[%s268 + $0x78] sm:$0xff]
      %v302 = vunpack.c.l.b16 %v269
      %v303 = vunpack.c.h.b16 %v269
      %v304 = vunpack.c.l.b16 %v270
      %v305 = vunpack.c.h.b16 %v270
      %v306 = vunpack.c.l.b16 %v271
      %v307 = vunpack.c.h.b16 %v271
      %v308 = vunpack.c.l.b16 %v272
      %v309 = vunpack.c.h.b16 %v272
      %v310 = vunpack.c.l.b16 %v273
      %v311 = vunpack.c.h.b16 %v273
      %v312 = vunpack.c.l.b16 %v274
      %v313 = vunpack.c.h.b16 %v274
      %v314 = vunpack.c.l.b16 %v275
      %v315 = vunpack.c.h.b16 %v275
      %v316 = vunpack.c.l.b16 %v276
      %v317 = vunpack.c.h.b16 %v276
      %v318 = vunpack.c.l.b16 %v277
      %v319 = vunpack.c.h.b16 %v277
      %v320 = vunpack.c.l.b16 %v278
      %v321 = vunpack.c.h.b16 %v278
      %v322 = vunpack.c.l.b16 %v279
      %v323 = vunpack.c.h.b16 %v279
      %v324 = vunpack.c.l.b16 %v280
      %v325 = vunpack.c.h.b16 %v280
      %v326 = vunpack.c.l.b16 %v281
      %v327 = vunpack.c.h.b16 %v281
      %v328 = vunpack.c.l.b16 %v282
      %v329 = vunpack.c.h.b16 %v282
      %v330 = vunpack.c.l.b16 %v283
      %v331 = vunpack.c.h.b16 %v283
      %v332 = vunpack.c.l.b16 %v284
      %v333 = vunpack.c.h.b16 %v284
      %v334 = vpack.c.b16 %v304, %v302
      %v335 = vpack.c.b16 %v305, %v303
      %v336 = vpack.c.b16 %v308, %v306
      %v337 = vpack.c.b16 %v309, %v307
      %v338 = vpack.c.b16 %v312, %v310
      %v339 = vpack.c.b16 %v313, %v311
      %v340 = vpack.c.b16 %v316, %v314
      %v341 = vpack.c.b16 %v317, %v315
      %v342 = vpack.c.b16 %v320, %v318
      %v343 = vpack.c.b16 %v321, %v319
      %v344 = vpack.c.b16 %v324, %v322
      %v345 = vpack.c.b16 %v325, %v323
      %v346 = vpack.c.b16 %v328, %v326
      %v347 = vpack.c.b16 %v329, %v327
      %v348 = vpack.c.b16 %v332, %v330
      %v349 = vpack.c.b16 %v333, %v331
      %366 = vmatpush.bf16.msra.mxu0 %v348
      %367 = vmatpush.bf16.msra.mxu0 %v346
      %368 = vmatpush.bf16.msra.mxu0 %v344
      %369 = vmatpush.bf16.msra.mxu0 %v342
      %370 = vmatpush.bf16.msra.mxu0 %v340
      %371 = vmatpush.bf16.msra.mxu0 %v338
      %372 = vmatpush.bf16.msra.mxu0 %v336
      %373 = vmatpush.bf16.msra.mxu0 %v334
      %374 = vmatmul.bf16.gmra.mxu0 %v232
      %v375 = vpop.f32.mrf.mxu0
      %v376 = vadd.f32 0.0, %v375
      %v377 = vpop.f32.mrf.mxu0
      %v378 = vadd.f32 0.0, %v377
      %379 = vdwg.mxu0
      %380 = vmatpush.bf16.msra.mxu0 %v349
      %381 = vmatpush.bf16.msra.mxu0 %v347
      %382 = vmatpush.bf16.msra.mxu0 %v345
      %383 = vmatpush.bf16.msra.mxu0 %v343
      %384 = vmatpush.bf16.msra.mxu0 %v341
      %385 = vmatpush.bf16.msra.mxu0 %v339
      %386 = vmatpush.bf16.msra.mxu0 %v337
      %387 = vmatpush.bf16.msra.mxu0 %v335
      %388 = vmatmul.bf16.gmra.mxu0 %v232
      %v389 = vpop.f32.mrf.mxu0
      %v390 = vadd.f32 0.0, %v389
      %v391 = vpop.f32.mrf.mxu0
      %v392 = vadd.f32 0.0, %v391
      %393 = vdwg.mxu0
      %v410 = vunpack.c.l.b16 %v252
      %v411 = vunpack.c.h.b16 %v252
      %v412 = vunpack.c.l.b16 %v253
      %v413 = vunpack.c.h.b16 %v253
      %v414 = vunpack.c.l.b16 %v254
      %v415 = vunpack.c.h.b16 %v254
      %v416 = vunpack.c.l.b16 %v255
      %v417 = vunpack.c.h.b16 %v255
      %v418 = vunpack.c.l.b16 %v256
      %v419 = vunpack.c.h.b16 %v256
      %v420 = vunpack.c.l.b16 %v257
      %v421 = vunpack.c.h.b16 %v257
      %v422 = vunpack.c.l.b16 %v258
      %v423 = vunpack.c.h.b16 %v258
      %v424 = vunpack.c.l.b16 %v259
      %v425 = vunpack.c.h.b16 %v259
      %v426 = vunpack.c.l.b16 %v260
      %v427 = vunpack.c.h.b16 %v260
      %v428 = vunpack.c.l.b16 %v261
      %v429 = vunpack.c.h.b16 %v261
      %v430 = vunpack.c.l.b16 %v262
      %v431 = vunpack.c.h.b16 %v262
      %v432 = vunpack.c.l.b16 %v263
      %v433 = vunpack.c.h.b16 %v263
      %v434 = vunpack.c.l.b16 %v264
      %v435 = vunpack.c.h.b16 %v264
      %v436 = vunpack.c.l.b16 %v265
      %v437 = vunpack.c.h.b16 %v265
      %v438 = vunpack.c.l.b16 %v266
      %v439 = vunpack.c.h.b16 %v266
      %v440 = vunpack.c.l.b16 %v267
      %v441 = vunpack.c.h.b16 %v267
      %v442 = vpack.c.b16 %v412, %v410
      %v443 = vpack.c.b16 %v413, %v411
      %v444 = vpack.c.b16 %v416, %v414
      %v445 = vpack.c.b16 %v417, %v415
      %v446 = vpack.c.b16 %v420, %v418
      %v447 = vpack.c.b16 %v421, %v419
      %v448 = vpack.c.b16 %v424, %v422
      %v449 = vpack.c.b16 %v425, %v423
      %v450 = vpack.c.b16 %v428, %v426
      %v451 = vpack.c.b16 %v429, %v427
      %v452 = vpack.c.b16 %v432, %v430
      %v453 = vpack.c.b16 %v433, %v431
      %v454 = vpack.c.b16 %v436, %v434
      %v455 = vpack.c.b16 %v437, %v435
      %v456 = vpack.c.b16 %v440, %v438
      %v457 = vpack.c.b16 %v441, %v439
      %474 = vmatpush.bf16.msra.mxu0 %v456
      %475 = vmatpush.bf16.msra.mxu0 %v454
      %476 = vmatpush.bf16.msra.mxu0 %v452
      %477 = vmatpush.bf16.msra.mxu0 %v450
      %478 = vmatpush.bf16.msra.mxu0 %v448
      %479 = vmatpush.bf16.msra.mxu0 %v446
      %480 = vmatpush.bf16.msra.mxu0 %v444
      %481 = vmatpush.bf16.msra.mxu0 %v442
      %482 = vmatmul.bf16.gmra.mxu0 %v244
      %v483 = vpop.f32.mrf.mxu0
      %v484 = vadd.f32 %v376, %v483
      %v485 = vpop.f32.mrf.mxu0
      %v486 = vadd.f32 %v378, %v485
      %487 = vdwg.mxu0
      %488 = vmatpush.bf16.msra.mxu0 %v457
      %489 = vmatpush.bf16.msra.mxu0 %v455
      %490 = vmatpush.bf16.msra.mxu0 %v453
      %491 = vmatpush.bf16.msra.mxu0 %v451
      %492 = vmatpush.bf16.msra.mxu0 %v449
      %493 = vmatpush.bf16.msra.mxu0 %v447
      %494 = vmatpush.bf16.msra.mxu0 %v445
      %495 = vmatpush.bf16.msra.mxu0 %v443
      %496 = vmatmul.bf16.gmra.mxu0 %v244
      %v497 = vpop.f32.mrf.mxu0
      %v498 = vadd.f32 %v390, %v497
      %v499 = vpop.f32.mrf.mxu0
      %v500 = vadd.f32 %v392, %v499
      %501 = vdwg.mxu0
      %s502 = scalar_lea.vmem %s1, 256
      %v503 = vld [vmem:[%s502] sm:$0xff]
      %v504 = vld [vmem:[%s502 + $0x8] sm:$0xff]
      %v505 = vld [vmem:[%s502 + $0x10] sm:$0xff]
      %v506 = vld [vmem:[%s502 + $0x18] sm:$0xff]
      %v507 = vld [vmem:[%s502 + $0x20] sm:$0xff]
      %v508 = vld [vmem:[%s502 + $0x28] sm:$0xff]
      %v509 = vld [vmem:[%s502 + $0x30] sm:$0xff]
      %v510 = vld [vmem:[%s502 + $0x38] sm:$0xff]
      %v511 = vld [vmem:[%s502 + $0x40] sm:$0xff]
      %v512 = vld [vmem:[%s502 + $0x48] sm:$0xff]
      %v513 = vld [vmem:[%s502 + $0x50] sm:$0xff]
      %v514 = vld [vmem:[%s502 + $0x58] sm:$0xff]
      %v515 = vld [vmem:[%s502 + $0x60] sm:$0xff]
      %v516 = vld [vmem:[%s502 + $0x68] sm:$0xff]
      %v517 = vld [vmem:[%s502 + $0x70] sm:$0xff]
      %v518 = vld [vmem:[%s502 + $0x78] sm:$0xff]
      %v535 = vunpack.c.l.b16 %v503
      %v536 = vunpack.c.h.b16 %v503
      %v537 = vunpack.c.l.b16 %v504
      %v538 = vunpack.c.h.b16 %v504
      %v539 = vunpack.c.l.b16 %v505
      %v540 = vunpack.c.h.b16 %v505
      %v541 = vunpack.c.l.b16 %v506
      %v542 = vunpack.c.h.b16 %v506
      %v543 = vunpack.c.l.b16 %v507
      %v544 = vunpack.c.h.b16 %v507
      %v545 = vunpack.c.l.b16 %v508
      %v546 = vunpack.c.h.b16 %v508
      %v547 = vunpack.c.l.b16 %v509
      %v548 = vunpack.c.h.b16 %v509
      %v549 = vunpack.c.l.b16 %v510
      %v550 = vunpack.c.h.b16 %v510
      %v551 = vunpack.c.l.b16 %v511
      %v552 = vunpack.c.h.b16 %v511
      %v553 = vunpack.c.l.b16 %v512
      %v554 = vunpack.c.h.b16 %v512
      %v555 = vunpack.c.l.b16 %v513
      %v556 = vunpack.c.h.b16 %v513
      %v557 = vunpack.c.l.b16 %v514
      %v558 = vunpack.c.h.b16 %v514
      %v559 = vunpack.c.l.b16 %v515
      %v560 = vunpack.c.h.b16 %v515
      %v561 = vunpack.c.l.b16 %v516
      %v562 = vunpack.c.h.b16 %v516
      %v563 = vunpack.c.l.b16 %v517
      %v564 = vunpack.c.h.b16 %v517
      %v565 = vunpack.c.l.b16 %v518
      %v566 = vunpack.c.h.b16 %v518
      %v567 = vpack.c.b16 %v537, %v535
      %v568 = vpack.c.b16 %v538, %v536
      %v569 = vpack.c.b16 %v541, %v539
      %v570 = vpack.c.b16 %v542, %v540
      %v571 = vpack.c.b16 %v545, %v543
      %v572 = vpack.c.b16 %v546, %v544
      %v573 = vpack.c.b16 %v549, %v547
      %v574 = vpack.c.b16 %v550, %v548
      %v575 = vpack.c.b16 %v553, %v551
      %v576 = vpack.c.b16 %v554, %v552
      %v577 = vpack.c.b16 %v557, %v555
      %v578 = vpack.c.b16 %v558, %v556
      %v579 = vpack.c.b16 %v561, %v559
      %v580 = vpack.c.b16 %v562, %v560
      %v581 = vpack.c.b16 %v565, %v563
      %v582 = vpack.c.b16 %v566, %v564
      %599 = vmatpush.bf16.msra.mxu0 %v581
      %600 = vmatpush.bf16.msra.mxu0 %v579
      %601 = vmatpush.bf16.msra.mxu0 %v577
      %602 = vmatpush.bf16.msra.mxu0 %v575
      %603 = vmatpush.bf16.msra.mxu0 %v573
      %604 = vmatpush.bf16.msra.mxu0 %v571
      %605 = vmatpush.bf16.msra.mxu0 %v569
      %606 = vmatpush.bf16.msra.mxu0 %v567
      %607 = vmatmul.bf16.gmra.mxu0 %v251
      %v608 = vpop.f32.mrf.mxu0
      %v609 = vadd.f32 0.0, %v608
      %v610 = vpop.f32.mrf.mxu0
      %v611 = vadd.f32 0.0, %v610
      %612 = vdwg.mxu0
      %613 = vmatpush.bf16.msra.mxu0 %v582
      %614 = vmatpush.bf16.msra.mxu0 %v580
      %615 = vmatpush.bf16.msra.mxu0 %v578
      %616 = vmatpush.bf16.msra.mxu0 %v576
      %617 = vmatpush.bf16.msra.mxu0 %v574
      %618 = vmatpush.bf16.msra.mxu0 %v572
      %619 = vmatpush.bf16.msra.mxu0 %v570
      %620 = vmatpush.bf16.msra.mxu0 %v568
      %621 = vmatmul.bf16.gmra.mxu0 %v251
      %v622 = vpop.f32.mrf.mxu0
      %v623 = vadd.f32 0.0, %v622
      %v624 = vpop.f32.mrf.mxu0
      %v625 = vadd.f32 0.0, %v624
      %626 = vdwg.mxu0
      %v627 = vadd.f32 %v484, %v609
      %v628 = vadd.f32 %v498, %v623
      %v629 = vadd.f32 %v486, %v611
      %v630 = vadd.f32 %v500, %v625
      %v631 = vld [vmem:[%s2] sm:$0x3]
      %v633 = vperm.slane %v631, 0
      %v634 = vperm.slane %v631, 1
      %v637 = vadd.f32 %v627, %v633
      %v638 = vadd.f32 %v628, %v634
      %v639 = vadd.f32 %v629, %v633
      %v640 = vadd.f32 %v630, %v634
      %v641 = vmax.f32 %v637, 0.0
      %v642 = vmax.f32 %v638, 0.0
      %v643 = vmax.f32 %v639, 0.0
      %v644 = vmax.f32 %v640, 0.0
      %v645 = vpack.c.bf16 %v642, %v641
      %v646 = vpack.c.bf16 %v644, %v643
      %v649 = vunpack.c.l.b16 %v645
      %v650 = vunpack.c.h.b16 %v645
      %v651 = vunpack.c.l.b16 %v646
      %v652 = vunpack.c.h.b16 %v646
      %v653 = vpack.c.b16 %v651, %v649
      %v654 = vpack.c.b16 %v652, %v650
      %v656 = vshrl.u32 %v653, 16
      %v658 = vrot.slane %v656, 7
      %v659 = vshll.u32 %v653, 16
      %v661 = vor.u32 %v658, %v659
      %v663 = vshrl.u32 %v654, 16
      %v665 = vrot.slane %v663, 7
      %v666 = vshll.u32 %v654, 16
      %v668 = vor.u32 %v665, %v666
      %v671 = vsel %vm243, 0, %v661
      %v672 = vsel %vm243, 0, %v668
      %v673 = vrot.slane %v659, 1
      %v674 = vor.u32 %v656, %v673
      %v675 = vrot.slane %v666, 1
      %v676 = vor.u32 %v663, %v675
      %v679 = vsel %vm250, %v674, 0
      %v680 = vsel %vm250, %v676, 0
      %v681 = vld [vmem:[%s3] sm:$0xff]
      %v682 = vld [vmem:[%s3 + $0x8] sm:$0xff]
      %v683 = vld [vmem:[%s3 + $0x10] sm:$0xff]
      %v684 = vld [vmem:[%s3 + $0x18] sm:$0xff]
      %v685 = vld [vmem:[%s3 + $0x20] sm:$0xff]
      %v686 = vld [vmem:[%s3 + $0x28] sm:$0xff]
      %v687 = vld [vmem:[%s3 + $0x30] sm:$0xff]
      %v688 = vld [vmem:[%s3 + $0x38] sm:$0xff]
      %v689 = vld [vmem:[%s3 + $0x40] sm:$0xff]
      %v690 = vld [vmem:[%s3 + $0x48] sm:$0xff]
      %v691 = vld [vmem:[%s3 + $0x50] sm:$0xff]
      %v692 = vld [vmem:[%s3 + $0x58] sm:$0xff]
      %v693 = vld [vmem:[%s3 + $0x60] sm:$0xff]
      %v694 = vld [vmem:[%s3 + $0x68] sm:$0xff]
      %v695 = vld [vmem:[%s3 + $0x70] sm:$0xff]
      %v696 = vld [vmem:[%s3 + $0x78] sm:$0xff]
      %v697 = vld [vmem:[%s3 + $0x80] sm:$0xff]
      %v698 = vld [vmem:[%s3 + $0x88] sm:$0xff]
      %v699 = vld [vmem:[%s3 + $0x90] sm:$0xff]
      %v700 = vld [vmem:[%s3 + $0x98] sm:$0xff]
      %v701 = vld [vmem:[%s3 + $0xa0] sm:$0xff]
      %v702 = vld [vmem:[%s3 + $0xa8] sm:$0xff]
      %v703 = vld [vmem:[%s3 + $0xb0] sm:$0xff]
      %v704 = vld [vmem:[%s3 + $0xb8] sm:$0xff]
      %v705 = vld [vmem:[%s3 + $0xc0] sm:$0xff]
      %v706 = vld [vmem:[%s3 + $0xc8] sm:$0xff]
      %v707 = vld [vmem:[%s3 + $0xd0] sm:$0xff]
      %v708 = vld [vmem:[%s3 + $0xd8] sm:$0xff]
      %v709 = vld [vmem:[%s3 + $0xe0] sm:$0xff]
      %v710 = vld [vmem:[%s3 + $0xe8] sm:$0xff]
      %v711 = vld [vmem:[%s3 + $0xf0] sm:$0xff]
      %v712 = vld [vmem:[%s3 + $0xf8] sm:$0xff]
      %s713 = scalar_lea.vmem %s3, 256
      %v714 = vld [vmem:[%s713] sm:$0xff]
      %v715 = vld [vmem:[%s713 + $0x8] sm:$0xff]
      %v716 = vld [vmem:[%s713 + $0x10] sm:$0xff]
      %v717 = vld [vmem:[%s713 + $0x18] sm:$0xff]
      %v718 = vld [vmem:[%s713 + $0x20] sm:$0xff]
      %v719 = vld [vmem:[%s713 + $0x28] sm:$0xff]
      %v720 = vld [vmem:[%s713 + $0x30] sm:$0xff]
      %v721 = vld [vmem:[%s713 + $0x38] sm:$0xff]
      %v722 = vld [vmem:[%s713 + $0x40] sm:$0xff]
      %v723 = vld [vmem:[%s713 + $0x48] sm:$0xff]
      %v724 = vld [vmem:[%s713 + $0x50] sm:$0xff]
      %v725 = vld [vmem:[%s713 + $0x58] sm:$0xff]
      %v726 = vld [vmem:[%s713 + $0x60] sm:$0xff]
      %v727 = vld [vmem:[%s713 + $0x68] sm:$0xff]
      %v728 = vld [vmem:[%s713 + $0x70] sm:$0xff]
      %v729 = vld [vmem:[%s713 + $0x78] sm:$0xff]
      %v730 = vld [vmem:[%s713 + $0x80] sm:$0xff]
      %v731 = vld [vmem:[%s713 + $0x88] sm:$0xff]
      %v732 = vld [vmem:[%s713 + $0x90] sm:$0xff]
      %v733 = vld [vmem:[%s713 + $0x98] sm:$0xff]
      %v734 = vld [vmem:[%s713 + $0xa0] sm:$0xff]
      %v735 = vld [vmem:[%s713 + $0xa8] sm:$0xff]
      %v736 = vld [vmem:[%s713 + $0xb0] sm:$0xff]
      %v737 = vld [vmem:[%s713 + $0xb8] sm:$0xff]
      %v738 = vld [vmem:[%s713 + $0xc0] sm:$0xff]
      %v739 = vld [vmem:[%s713 + $0xc8] sm:$0xff]
      %v740 = vld [vmem:[%s713 + $0xd0] sm:$0xff]
      %v741 = vld [vmem:[%s713 + $0xd8] sm:$0xff]
      %v742 = vld [vmem:[%s713 + $0xe0] sm:$0xff]
      %v743 = vld [vmem:[%s713 + $0xe8] sm:$0xff]
      %v744 = vld [vmem:[%s713 + $0xf0] sm:$0xff]
      %v745 = vld [vmem:[%s713 + $0xf8] sm:$0xff]
      %v780 = vunpack.c.l.b16 %v714
      %v781 = vunpack.c.h.b16 %v714
      %v782 = vunpack.c.l.b16 %v715
      %v783 = vunpack.c.h.b16 %v715
      %v784 = vunpack.c.l.b16 %v716
      %v785 = vunpack.c.h.b16 %v716
      %v786 = vunpack.c.l.b16 %v717
      %v787 = vunpack.c.h.b16 %v717
      %v788 = vunpack.c.l.b16 %v718
      %v789 = vunpack.c.h.b16 %v718
      %v790 = vunpack.c.l.b16 %v719
      %v791 = vunpack.c.h.b16 %v719
      %v792 = vunpack.c.l.b16 %v720
      %v793 = vunpack.c.h.b16 %v720
      %v794 = vunpack.c.l.b16 %v721
      %v795 = vunpack.c.h.b16 %v721
      %v796 = vunpack.c.l.b16 %v722
      %v797 = vunpack.c.h.b16 %v722
      %v798 = vunpack.c.l.b16 %v723
      %v799 = vunpack.c.h.b16 %v723
      %v800 = vunpack.c.l.b16 %v724
      %v801 = vunpack.c.h.b16 %v724
      %v802 = vunpack.c.l.b16 %v725
      %v803 = vunpack.c.h.b16 %v725
      %v804 = vunpack.c.l.b16 %v726
      %v805 = vunpack.c.h.b16 %v726
      %v806 = vunpack.c.l.b16 %v727
      %v807 = vunpack.c.h.b16 %v727
      %v808 = vunpack.c.l.b16 %v728
      %v809 = vunpack.c.h.b16 %v728
      %v810 = vunpack.c.l.b16 %v729
      %v811 = vunpack.c.h.b16 %v729
      %v812 = vunpack.c.l.b16 %v730
      %v813 = vunpack.c.h.b16 %v730
      %v814 = vunpack.c.l.b16 %v731
      %v815 = vunpack.c.h.b16 %v731
      %v816 = vunpack.c.l.b16 %v732
      %v817 = vunpack.c.h.b16 %v732
      %v818 = vunpack.c.l.b16 %v733
      %v819 = vunpack.c.h.b16 %v733
      %v820 = vunpack.c.l.b16 %v734
      %v821 = vunpack.c.h.b16 %v734
      %v822 = vunpack.c.l.b16 %v735
      %v823 = vunpack.c.h.b16 %v735
      %v824 = vunpack.c.l.b16 %v736
      %v825 = vunpack.c.h.b16 %v736
      %v826 = vunpack.c.l.b16 %v737
      %v827 = vunpack.c.h.b16 %v737
      %v828 = vunpack.c.l.b16 %v738
      %v829 = vunpack.c.h.b16 %v738
      %v830 = vunpack.c.l.b16 %v739
      %v831 = vunpack.c.h.b16 %v739
      %v832 = vunpack.c.l.b16 %v740
      %v833 = vunpack.c.h.b16 %v740
      %v834 = vunpack.c.l.b16 %v741
      %v835 = vunpack.c.h.b16 %v741
      %v836 = vunpack.c.l.b16 %v742
      %v837 = vunpack.c.h.b16 %v742
      %v838 = vunpack.c.l.b16 %v743
      %v839 = vunpack.c.h.b16 %v743
      %v840 = vunpack.c.l.b16 %v744
      %v841 = vunpack.c.h.b16 %v744
      %v842 = vunpack.c.l.b16 %v745
      %v843 = vunpack.c.h.b16 %v745
      %v844 = vpack.c.b16 %v782, %v780
      %v845 = vpack.c.b16 %v783, %v781
      %v846 = vpack.c.b16 %v786, %v784
      %v847 = vpack.c.b16 %v787, %v785
      %v848 = vpack.c.b16 %v790, %v788
      %v849 = vpack.c.b16 %v791, %v789
      %v850 = vpack.c.b16 %v794, %v792
      %v851 = vpack.c.b16 %v795, %v793
      %v852 = vpack.c.b16 %v798, %v796
      %v853 = vpack.c.b16 %v799, %v797
      %v854 = vpack.c.b16 %v802, %v800
      %v855 = vpack.c.b16 %v803, %v801
      %v856 = vpack.c.b16 %v806, %v804
      %v857 = vpack.c.b16 %v807, %v805
      %v858 = vpack.c.b16 %v810, %v808
      %v859 = vpack.c.b16 %v811, %v809
      %v860 = vpack.c.b16 %v814, %v812
      %v861 = vpack.c.b16 %v815, %v813
      %v862 = vpack.c.b16 %v818, %v816
      %v863 = vpack.c.b16 %v819, %v817
      %v864 = vpack.c.b16 %v822, %v820
      %v865 = vpack.c.b16 %v823, %v821
      %v866 = vpack.c.b16 %v826, %v824
      %v867 = vpack.c.b16 %v827, %v825
      %v868 = vpack.c.b16 %v830, %v828
      %v869 = vpack.c.b16 %v831, %v829
      %v870 = vpack.c.b16 %v834, %v832
      %v871 = vpack.c.b16 %v835, %v833
      %v872 = vpack.c.b16 %v838, %v836
      %v873 = vpack.c.b16 %v839, %v837
      %v874 = vpack.c.b16 %v842, %v840
      %v875 = vpack.c.b16 %v843, %v841
      %908 = vmatpush.bf16.msra.mxu0 %v858
      %909 = vmatpush.bf16.msra.mxu0 %v856
      %910 = vmatpush.bf16.msra.mxu0 %v854
      %911 = vmatpush.bf16.msra.mxu0 %v852
      %912 = vmatpush.bf16.msra.mxu0 %v850
      %913 = vmatpush.bf16.msra.mxu0 %v848
      %914 = vmatpush.bf16.msra.mxu0 %v846
      %915 = vmatpush.bf16.msra.mxu0 %v844
      %916 = vmatmul.bf16.gmra.mxu0 %v653
      %v917 = vpop.f32.mrf.mxu0
      %v918 = vadd.f32 0.0, %v917
      %v919 = vpop.f32.mrf.mxu0
      %v920 = vadd.f32 0.0, %v919
      %921 = vdwg.mxu0
      %922 = vmatpush.bf16.msra.mxu0 %v874
      %923 = vmatpush.bf16.msra.mxu0 %v872
      %924 = vmatpush.bf16.msra.mxu0 %v870
      %925 = vmatpush.bf16.msra.mxu0 %v868
      %926 = vmatpush.bf16.msra.mxu0 %v866
      %927 = vmatpush.bf16.msra.mxu0 %v864
      %928 = vmatpush.bf16.msra.mxu0 %v862
      %929 = vmatpush.bf16.msra.mxu0 %v860
      %930 = vmatmul.bf16.gmra.mxu0 %v654
      %v931 = vpop.f32.mrf.mxu0
      %v932 = vadd.f32 %v918, %v931
      %v933 = vpop.f32.mrf.mxu0
      %v934 = vadd.f32 %v920, %v933
      %935 = vdwg.mxu0
      %936 = vmatpush.bf16.msra.mxu0 %v859
      %937 = vmatpush.bf16.msra.mxu0 %v857
      %938 = vmatpush.bf16.msra.mxu0 %v855
      %939 = vmatpush.bf16.msra.mxu0 %v853
      %940 = vmatpush.bf16.msra.mxu0 %v851
      %941 = vmatpush.bf16.msra.mxu0 %v849
      %942 = vmatpush.bf16.msra.mxu0 %v847
      %943 = vmatpush.bf16.msra.mxu0 %v845
      %944 = vmatmul.bf16.gmra.mxu0 %v653
      %v945 = vpop.f32.mrf.mxu0
      %v946 = vadd.f32 0.0, %v945
      %v947 = vpop.f32.mrf.mxu0
      %v948 = vadd.f32 0.0, %v947
      %949 = vdwg.mxu0
      %950 = vmatpush.bf16.msra.mxu0 %v875
      %951 = vmatpush.bf16.msra.mxu0 %v873
      %952 = vmatpush.bf16.msra.mxu0 %v871
      %953 = vmatpush.bf16.msra.mxu0 %v869
      %954 = vmatpush.bf16.msra.mxu0 %v867
      %955 = vmatpush.bf16.msra.mxu0 %v865
      %956 = vmatpush.bf16.msra.mxu0 %v863
      %957 = vmatpush.bf16.msra.mxu0 %v861
      %958 = vmatmul.bf16.gmra.mxu0 %v654
      %v959 = vpop.f32.mrf.mxu0
      %v960 = vadd.f32 %v946, %v959
      %v961 = vpop.f32.mrf.mxu0
      %v962 = vadd.f32 %v948, %v961
      %963 = vdwg.mxu0
      %v996 = vunpack.c.l.b16 %v681
      %v997 = vunpack.c.h.b16 %v681
      %v998 = vunpack.c.l.b16 %v682
      %v999 = vunpack.c.h.b16 %v682
      %v1000 = vunpack.c.l.b16 %v683
      %v1001 = vunpack.c.h.b16 %v683
      %v1002 = vunpack.c.l.b16 %v684
      %v1003 = vunpack.c.h.b16 %v684
      %v1004 = vunpack.c.l.b16 %v685
      %v1005 = vunpack.c.h.b16 %v685
      %v1006 = vunpack.c.l.b16 %v686
      %v1007 = vunpack.c.h.b16 %v686
      %v1008 = vunpack.c.l.b16 %v687
      %v1009 = vunpack.c.h.b16 %v687
      %v1010 = vunpack.c.l.b16 %v688
      %v1011 = vunpack.c.h.b16 %v688
      %v1012 = vunpack.c.l.b16 %v689
      %v1013 = vunpack.c.h.b16 %v689
      %v1014 = vunpack.c.l.b16 %v690
      %v1015 = vunpack.c.h.b16 %v690
      %v1016 = vunpack.c.l.b16 %v691
      %v1017 = vunpack.c.h.b16 %v691
      %v1018 = vunpack.c.l.b16 %v692
      %v1019 = vunpack.c.h.b16 %v692
      %v1020 = vunpack.c.l.b16 %v693
      %v1021 = vunpack.c.h.b16 %v693
      %v1022 = vunpack.c.l.b16 %v694
      %v1023 = vunpack.c.h.b16 %v694
      %v1024 = vunpack.c.l.b16 %v695
      %v1025 = vunpack.c.h.b16 %v695
      %v1026 = vunpack.c.l.b16 %v696
      %v1027 = vunpack.c.h.b16 %v696
      %v1028 = vunpack.c.l.b16 %v697
      %v1029 = vunpack.c.h.b16 %v697
      %v1030 = vunpack.c.l.b16 %v698
      %v1031 = vunpack.c.h.b16 %v698
      %v1032 = vunpack.c.l.b16 %v699
      %v1033 = vunpack.c.h.b16 %v699
      %v1034 = vunpack.c.l.b16 %v700
      %v1035 = vunpack.c.h.b16 %v700
      %v1036 = vunpack.c.l.b16 %v701
      %v1037 = vunpack.c.h.b16 %v701
      %v1038 = vunpack.c.l.b16 %v702
      %v1039 = vunpack.c.h.b16 %v702
      %v1040 = vunpack.c.l.b16 %v703
      %v1041 = vunpack.c.h.b16 %v703
      %v1042 = vunpack.c.l.b16 %v704
      %v1043 = vunpack.c.h.b16 %v704
      %v1044 = vunpack.c.l.b16 %v705
      %v1045 = vunpack.c.h.b16 %v705
      %v1046 = vunpack.c.l.b16 %v706
      %v1047 = vunpack.c.h.b16 %v706
      %v1048 = vunpack.c.l.b16 %v707
      %v1049 = vunpack.c.h.b16 %v707
      %v1050 = vunpack.c.l.b16 %v708
      %v1051 = vunpack.c.h.b16 %v708
      %v1052 = vunpack.c.l.b16 %v709
      %v1053 = vunpack.c.h.b16 %v709
      %v1054 = vunpack.c.l.b16 %v710
      %v1055 = vunpack.c.h.b16 %v710
      %v1056 = vunpack.c.l.b16 %v711
      %v1057 = vunpack.c.h.b16 %v711
      %v1058 = vunpack.c.l.b16 %v712
      %v1059 = vunpack.c.h.b16 %v712
      %v1060 = vpack.c.b16 %v998, %v996
      %v1061 = vpack.c.b16 %v999, %v997
      %v1062 = vpack.c.b16 %v1002, %v1000
      %v1063 = vpack.c.b16 %v1003, %v1001
      %v1064 = vpack.c.b16 %v1006, %v1004
      %v1065 = vpack.c.b16 %v1007, %v1005
      %v1066 = vpack.c.b16 %v1010, %v1008
      %v1067 = vpack.c.b16 %v1011, %v1009
      %v1068 = vpack.c.b16 %v1014, %v1012
      %v1069 = vpack.c.b16 %v1015, %v1013
      %v1070 = vpack.c.b16 %v1018, %v1016
      %v1071 = vpack.c.b16 %v1019, %v1017
      %v1072 = vpack.c.b16 %v1022, %v1020
      %v1073 = vpack.c.b16 %v1023, %v1021
      %v1074 = vpack.c.b16 %v1026, %v1024
      %v1075 = vpack.c.b16 %v1027, %v1025
      %v1076 = vpack.c.b16 %v1030, %v1028
      %v1077 = vpack.c.b16 %v1031, %v1029
      %v1078 = vpack.c.b16 %v1034, %v1032
      %v1079 = vpack.c.b16 %v1035, %v1033
      %v1080 = vpack.c.b16 %v1038, %v1036
      %v1081 = vpack.c.b16 %v1039, %v1037
      %v1082 = vpack.c.b16 %v1042, %v1040
      %v1083 = vpack.c.b16 %v1043, %v1041
      %v1084 = vpack.c.b16 %v1046, %v1044
      %v1085 = vpack.c.b16 %v1047, %v1045
      %v1086 = vpack.c.b16 %v1050, %v1048
      %v1087 = vpack.c.b16 %v1051, %v1049
      %v1088 = vpack.c.b16 %v1054, %v1052
      %v1089 = vpack.c.b16 %v1055, %v1053
      %v1090 = vpack.c.b16 %v1058, %v1056
      %v1091 = vpack.c.b16 %v1059, %v1057
      %1124 = vmatpush.bf16.msra.mxu0 %v1074
      %1125 = vmatpush.bf16.msra.mxu0 %v1072
      %1126 = vmatpush.bf16.msra.mxu0 %v1070
      %1127 = vmatpush.bf16.msra.mxu0 %v1068
      %1128 = vmatpush.bf16.msra.mxu0 %v1066
      %1129 = vmatpush.bf16.msra.mxu0 %v1064
      %1130 = vmatpush.bf16.msra.mxu0 %v1062
      %1131 = vmatpush.bf16.msra.mxu0 %v1060
      %1132 = vmatmul.bf16.gmra.mxu0 %v671
      %v1133 = vpop.f32.mrf.mxu0
      %v1134 = vadd.f32 %v932, %v1133
      %v1135 = vpop.f32.mrf.mxu0
      %v1136 = vadd.f32 %v934, %v1135
      %1137 = vdwg.mxu0
      %1138 = vmatpush.bf16.msra.mxu0 %v1090
      %1139 = vmatpush.bf16.msra.mxu0 %v1088
      %1140 = vmatpush.bf16.msra.mxu0 %v1086
      %1141 = vmatpush.bf16.msra.mxu0 %v1084
      %1142 = vmatpush.bf16.msra.mxu0 %v1082
      %1143 = vmatpush.bf16.msra.mxu0 %v1080
      %1144 = vmatpush.bf16.msra.mxu0 %v1078
      %1145 = vmatpush.bf16.msra.mxu0 %v1076
      %1146 = vmatmul.bf16.gmra.mxu0 %v672
      %v1147 = vpop.f32.mrf.mxu0
      %v1148 = vadd.f32 %v1134, %v1147
      %v1149 = vpop.f32.mrf.mxu0
      %v1150 = vadd.f32 %v1136, %v1149
      %1151 = vdwg.mxu0
      %1152 = vmatpush.bf16.msra.mxu0 %v1075
      %1153 = vmatpush.bf16.msra.mxu0 %v1073
      %1154 = vmatpush.bf16.msra.mxu0 %v1071
      %1155 = vmatpush.bf16.msra.mxu0 %v1069
      %1156 = vmatpush.bf16.msra.mxu0 %v1067
      %1157 = vmatpush.bf16.msra.mxu0 %v1065
      %1158 = vmatpush.bf16.msra.mxu0 %v1063
      %1159 = vmatpush.bf16.msra.mxu0 %v1061
      %1160 = vmatmul.bf16.gmra.mxu0 %v671
      %v1161 = vpop.f32.mrf.mxu0
      %v1162 = vadd.f32 %v960, %v1161
      %v1163 = vpop.f32.mrf.mxu0
      %v1164 = vadd.f32 %v962, %v1163
      %1165 = vdwg.mxu0
      %1166 = vmatpush.bf16.msra.mxu0 %v1091
      %1167 = vmatpush.bf16.msra.mxu0 %v1089
      %1168 = vmatpush.bf16.msra.mxu0 %v1087
      %1169 = vmatpush.bf16.msra.mxu0 %v1085
      %1170 = vmatpush.bf16.msra.mxu0 %v1083
      %1171 = vmatpush.bf16.msra.mxu0 %v1081
      %1172 = vmatpush.bf16.msra.mxu0 %v1079
      %1173 = vmatpush.bf16.msra.mxu0 %v1077
      %1174 = vmatmul.bf16.gmra.mxu0 %v672
      %v1175 = vpop.f32.mrf.mxu0
      %v1176 = vadd.f32 %v1162, %v1175
      %v1177 = vpop.f32.mrf.mxu0
      %v1178 = vadd.f32 %v1164, %v1177
      %1179 = vdwg.mxu0
      %s1180 = scalar_lea.vmem %s3, 512
      %v1181 = vld [vmem:[%s1180] sm:$0xff]
      %v1182 = vld [vmem:[%s1180 + $0x8] sm:$0xff]
      %v1183 = vld [vmem:[%s1180 + $0x10] sm:$0xff]
      %v1184 = vld [vmem:[%s1180 + $0x18] sm:$0xff]
      %v1185 = vld [vmem:[%s1180 + $0x20] sm:$0xff]
      %v1186 = vld [vmem:[%s1180 + $0x28] sm:$0xff]
      %v1187 = vld [vmem:[%s1180 + $0x30] sm:$0xff]
      %v1188 = vld [vmem:[%s1180 + $0x38] sm:$0xff]
      %v1189 = vld [vmem:[%s1180 + $0x40] sm:$0xff]
      %v1190 = vld [vmem:[%s1180 + $0x48] sm:$0xff]
      %v1191 = vld [vmem:[%s1180 + $0x50] sm:$0xff]
      %v1192 = vld [vmem:[%s1180 + $0x58] sm:$0xff]
      %v1193 = vld [vmem:[%s1180 + $0x60] sm:$0xff]
      %v1194 = vld [vmem:[%s1180 + $0x68] sm:$0xff]
      %v1195 = vld [vmem:[%s1180 + $0x70] sm:$0xff]
      %v1196 = vld [vmem:[%s1180 + $0x78] sm:$0xff]
      %v1197 = vld [vmem:[%s1180 + $0x80] sm:$0xff]
      %v1198 = vld [vmem:[%s1180 + $0x88] sm:$0xff]
      %v1199 = vld [vmem:[%s1180 + $0x90] sm:$0xff]
      %v1200 = vld [vmem:[%s1180 + $0x98] sm:$0xff]
      %v1201 = vld [vmem:[%s1180 + $0xa0] sm:$0xff]
      %v1202 = vld [vmem:[%s1180 + $0xa8] sm:$0xff]
      %v1203 = vld [vmem:[%s1180 + $0xb0] sm:$0xff]
      %v1204 = vld [vmem:[%s1180 + $0xb8] sm:$0xff]
      %v1205 = vld [vmem:[%s1180 + $0xc0] sm:$0xff]
      %v1206 = vld [vmem:[%s1180 + $0xc8] sm:$0xff]
      %v1207 = vld [vmem:[%s1180 + $0xd0] sm:$0xff]
      %v1208 = vld [vmem:[%s1180 + $0xd8] sm:$0xff]
      %v1209 = vld [vmem:[%s1180 + $0xe0] sm:$0xff]
      %v1210 = vld [vmem:[%s1180 + $0xe8] sm:$0xff]
      %v1211 = vld [vmem:[%s1180 + $0xf0] sm:$0xff]
      %v1212 = vld [vmem:[%s1180 + $0xf8] sm:$0xff]
      %v1245 = vunpack.c.l.b16 %v1181
      %v1246 = vunpack.c.h.b16 %v1181
      %v1247 = vunpack.c.l.b16 %v1182
      %v1248 = vunpack.c.h.b16 %v1182
      %v1249 = vunpack.c.l.b16 %v1183
      %v1250 = vunpack.c.h.b16 %v1183
      %v1251 = vunpack.c.l.b16 %v1184
      %v1252 = vunpack.c.h.b16 %v1184
      %v1253 = vunpack.c.l.b16 %v1185
      %v1254 = vunpack.c.h.b16 %v1185
      %v1255 = vunpack.c.l.b16 %v1186
      %v1256 = vunpack.c.h.b16 %v1186
      %v1257 = vunpack.c.l.b16 %v1187
      %v1258 = vunpack.c.h.b16 %v1187
      %v1259 = vunpack.c.l.b16 %v1188
      %v1260 = vunpack.c.h.b16 %v1188
      %v1261 = vunpack.c.l.b16 %v1189
      %v1262 = vunpack.c.h.b16 %v1189
      %v1263 = vunpack.c.l.b16 %v1190
      %v1264 = vunpack.c.h.b16 %v1190
      %v1265 = vunpack.c.l.b16 %v1191
      %v1266 = vunpack.c.h.b16 %v1191
      %v1267 = vunpack.c.l.b16 %v1192
      %v1268 = vunpack.c.h.b16 %v1192
      %v1269 = vunpack.c.l.b16 %v1193
      %v1270 = vunpack.c.h.b16 %v1193
      %v1271 = vunpack.c.l.b16 %v1194
      %v1272 = vunpack.c.h.b16 %v1194
      %v1273 = vunpack.c.l.b16 %v1195
      %v1274 = vunpack.c.h.b16 %v1195
      %v1275 = vunpack.c.l.b16 %v1196
      %v1276 = vunpack.c.h.b16 %v1196
      %v1277 = vunpack.c.l.b16 %v1197
      %v1278 = vunpack.c.h.b16 %v1197
      %v1279 = vunpack.c.l.b16 %v1198
      %v1280 = vunpack.c.h.b16 %v1198
      %v1281 = vunpack.c.l.b16 %v1199
      %v1282 = vunpack.c.h.b16 %v1199
      %v1283 = vunpack.c.l.b16 %v1200
      %v1284 = vunpack.c.h.b16 %v1200
      %v1285 = vunpack.c.l.b16 %v1201
      %v1286 = vunpack.c.h.b16 %v1201
      %v1287 = vunpack.c.l.b16 %v1202
      %v1288 = vunpack.c.h.b16 %v1202
      %v1289 = vunpack.c.l.b16 %v1203
      %v1290 = vunpack.c.h.b16 %v1203
      %v1291 = vunpack.c.l.b16 %v1204
      %v1292 = vunpack.c.h.b16 %v1204
      %v1293 = vunpack.c.l.b16 %v1205
      %v1294 = vunpack.c.h.b16 %v1205
      %v1295 = vunpack.c.l.b16 %v1206
      %v1296 = vunpack.c.h.b16 %v1206
      %v1297 = vunpack.c.l.b16 %v1207
      %v1298 = vunpack.c.h.b16 %v1207
      %v1299 = vunpack.c.l.b16 %v1208
      %v1300 = vunpack.c.h.b16 %v1208
      %v1301 = vunpack.c.l.b16 %v1209
      %v1302 = vunpack.c.h.b16 %v1209
      %v1303 = vunpack.c.l.b16 %v1210
      %v1304 = vunpack.c.h.b16 %v1210
      %v1305 = vunpack.c.l.b16 %v1211
      %v1306 = vunpack.c.h.b16 %v1211
      %v1307 = vunpack.c.l.b16 %v1212
      %v1308 = vunpack.c.h.b16 %v1212
      %v1309 = vpack.c.b16 %v1247, %v1245
      %v1310 = vpack.c.b16 %v1248, %v1246
      %v1311 = vpack.c.b16 %v1251, %v1249
      %v1312 = vpack.c.b16 %v1252, %v1250
      %v1313 = vpack.c.b16 %v1255, %v1253
      %v1314 = vpack.c.b16 %v1256, %v1254
      %v1315 = vpack.c.b16 %v1259, %v1257
      %v1316 = vpack.c.b16 %v1260, %v1258
      %v1317 = vpack.c.b16 %v1263, %v1261
      %v1318 = vpack.c.b16 %v1264, %v1262
      %v1319 = vpack.c.b16 %v1267, %v1265
      %v1320 = vpack.c.b16 %v1268, %v1266
      %v1321 = vpack.c.b16 %v1271, %v1269
      %v1322 = vpack.c.b16 %v1272, %v1270
      %v1323 = vpack.c.b16 %v1275, %v1273
      %v1324 = vpack.c.b16 %v1276, %v1274
      %v1325 = vpack.c.b16 %v1279, %v1277
      %v1326 = vpack.c.b16 %v1280, %v1278
      %v1327 = vpack.c.b16 %v1283, %v1281
      %v1328 = vpack.c.b16 %v1284, %v1282
      %v1329 = vpack.c.b16 %v1287, %v1285
      %v1330 = vpack.c.b16 %v1288, %v1286
      %v1331 = vpack.c.b16 %v1291, %v1289
      %v1332 = vpack.c.b16 %v1292, %v1290
      %v1333 = vpack.c.b16 %v1295, %v1293
      %v1334 = vpack.c.b16 %v1296, %v1294
      %v1335 = vpack.c.b16 %v1299, %v1297
      %v1336 = vpack.c.b16 %v1300, %v1298
      %v1337 = vpack.c.b16 %v1303, %v1301
      %v1338 = vpack.c.b16 %v1304, %v1302
      %v1339 = vpack.c.b16 %v1307, %v1305
      %v1340 = vpack.c.b16 %v1308, %v1306
      %1373 = vmatpush.bf16.msra.mxu0 %v1323
      %1374 = vmatpush.bf16.msra.mxu0 %v1321
      %1375 = vmatpush.bf16.msra.mxu0 %v1319
      %1376 = vmatpush.bf16.msra.mxu0 %v1317
      %1377 = vmatpush.bf16.msra.mxu0 %v1315
      %1378 = vmatpush.bf16.msra.mxu0 %v1313
      %1379 = vmatpush.bf16.msra.mxu0 %v1311
      %1380 = vmatpush.bf16.msra.mxu0 %v1309
      %1381 = vmatmul.bf16.gmra.mxu0 %v679
      %v1382 = vpop.f32.mrf.mxu0
      %v1383 = vadd.f32 0.0, %v1382
      %v1384 = vpop.f32.mrf.mxu0
      %v1385 = vadd.f32 0.0, %v1384
      %1386 = vdwg.mxu0
      %1387 = vmatpush.bf16.msra.mxu0 %v1339
      %1388 = vmatpush.bf16.msra.mxu0 %v1337
      %1389 = vmatpush.bf16.msra.mxu0 %v1335
      %1390 = vmatpush.bf16.msra.mxu0 %v1333
      %1391 = vmatpush.bf16.msra.mxu0 %v1331
      %1392 = vmatpush.bf16.msra.mxu0 %v1329
      %1393 = vmatpush.bf16.msra.mxu0 %v1327
      %1394 = vmatpush.bf16.msra.mxu0 %v1325
      %1395 = vmatmul.bf16.gmra.mxu0 %v680
      %v1396 = vpop.f32.mrf.mxu0
      %v1397 = vadd.f32 %v1383, %v1396
      %v1398 = vpop.f32.mrf.mxu0
      %v1399 = vadd.f32 %v1385, %v1398
      %1400 = vdwg.mxu0
      %1401 = vmatpush.bf16.msra.mxu0 %v1324
      %1402 = vmatpush.bf16.msra.mxu0 %v1322
      %1403 = vmatpush.bf16.msra.mxu0 %v1320
      %1404 = vmatpush.bf16.msra.mxu0 %v1318
      %1405 = vmatpush.bf16.msra.mxu0 %v1316
      %1406 = vmatpush.bf16.msra.mxu0 %v1314
      %1407 = vmatpush.bf16.msra.mxu0 %v1312
      %1408 = vmatpush.bf16.msra.mxu0 %v1310
      %1409 = vmatmul.bf16.gmra.mxu0 %v679
      %v1410 = vpop.f32.mrf.mxu0
      %v1411 = vadd.f32 0.0, %v1410
      %v1412 = vpop.f32.mrf.mxu0
      %v1413 = vadd.f32 0.0, %v1412
      %1414 = vdwg.mxu0
      %1415 = vmatpush.bf16.msra.mxu0 %v1340
      %1416 = vmatpush.bf16.msra.mxu0 %v1338
      %1417 = vmatpush.bf16.msra.mxu0 %v1336
      %1418 = vmatpush.bf16.msra.mxu0 %v1334
      %1419 = vmatpush.bf16.msra.mxu0 %v1332
      %1420 = vmatpush.bf16.msra.mxu0 %v1330
      %1421 = vmatpush.bf16.msra.mxu0 %v1328
      %1422 = vmatpush.bf16.msra.mxu0 %v1326
      %1423 = vmatmul.bf16.gmra.mxu0 %v680
      %v1424 = vpop.f32.mrf.mxu0
      %v1425 = vadd.f32 %v1411, %v1424
      %v1426 = vpop.f32.mrf.mxu0
      %v1427 = vadd.f32 %v1413, %v1426
      %1428 = vdwg.mxu0
      %v1429 = vadd.f32 %v1148, %v1397
      %v1430 = vadd.f32 %v1176, %v1425
      %v1431 = vadd.f32 %v1150, %v1399
      %v1432 = vadd.f32 %v1178, %v1427
      %v1433 = vld [vmem:[%s4] sm:$0x3]
      %v1435 = vperm.slane %v1433, 0
      %v1436 = vperm.slane %v1433, 1
      %v1439 = vadd.f32 %v1429, %v1435
      %v1440 = vadd.f32 %v1430, %v1436
      %v1441 = vadd.f32 %v1431, %v1435
      %v1442 = vadd.f32 %v1432, %v1436
      %v1443 = vmax.f32 %v1439, 0.0
      %v1444 = vmax.f32 %v1440, 0.0
      %v1445 = vmax.f32 %v1441, 0.0
      %v1446 = vmax.f32 %v1442, 0.0
      %1447 = vst [vmem:[%s224] sm:$0xff] %v1443
      %1448 = vst [vmem:[%s224 + $0x8] sm:$0xff] %v1444
      %1449 = vst [vmem:[%s224 + $0x10] sm:$0xff] %v1445
      %1450 = vst [vmem:[%s224 + $0x18] sm:$0xff] %v1446
      %p1451 = scmp.lt.s32.totalorder %s16, 1
      %s1452 = scalar_select %p1451, %s16, 1
      %s1453 = smul.addr %s1452, 4
      %s1454 = smul.addr %s1453, 8
      %s1455 = scalar_lea.vmem %s5, %s1454
      // Predicated region
      $region41: #{dimensional_reduction_forward.1} parent=39 // pred_check
        %p1456 = pneg %p144
      $region42: #{dimensional_reduction_forward.1} parent=39 // pred_check_branch
        %1458 = sbr.rel (%p1456) target = $region44
      $region43: #{dimensional_reduction_forward.1} parent=39 // pred_region
        _
      $region44: #{dimensional_reduction_forward.1} parent=39 // pred_fallthru
        _
    $region40: #{dimensional_reduction_forward.1} parent=5 // pred_fallthru
      _
    %p1459 = scmp.le.s32.totalorder 2, %s11
    // Predicated region
    $region45: #{dimensional_reduction_forward.1} parent=5 // pred_check
      %p1460 = pneg %p1459
    $region46: #{dimensional_reduction_forward.1} parent=5 // pred_check_branch
      %1462 = sbr.rel (%p1460) target = $region48
    $region47: #{dimensional_reduction_forward.1} parent=5 // pred_region
      %s1463 = ssub.s32 %s11, 2
      // Predicated region
      $region49: #{dimensional_reduction_forward.1} parent=47 // pred_check
        %p1464 = pneg %p150
      $region50: #{dimensional_reduction_forward.1} parent=47 // pred_check_branch
        %1466 = sbr.rel (%p1464) target = $region52
      $region51: #{dimensional_reduction_forward.1} parent=47 // pred_region
        %p1467 = scmp.lt.s32.totalorder %s17, 1
        %s1468 = scalar_select %p1467, %s17, 1
        %s1469 = smul.addr %s1468, 4
        %s1470 = smul.addr %s1469, 8
        %s1471 = scalar_lea.vmem %s5, %s1470
      $region52: #{dimensional_reduction_forward.1} parent=47 // pred_fallthru
        _
    $region48: #{dimensional_reduction_forward.1} parent=5 // pred_fallthru
      _
  $region6: #{dimensional_reduction_forward.1} parent=0 // loop_footer
    %s15 = sadd.s32 1, %s11
  $region7: #{dimensional_reduction_forward.1} parent=0 // loop_footer_branch
    %10 = sbr.rel target = $region3
  $region8: #{dimensional_reduction_forward.1} parent=0 // loop_exit
    _

</llo_original>
